<compile_context>
chip_gen: v7x
topology: tpu7x:2x2x1
jax: 0.10.0
libtpu: 0.0.40
codegen_flags: <defaults>
</compile_context>

<pallas_src>
import jax
import jax.numpy as jnp
from jax.experimental import pallas as pl
from jax.experimental.pallas import tpu as pltpu

N_FEATURES = 32      # "n" = x_train.shape[1]
H1 = 16
H2 = 8
N_CLASSES = 2


def mlp_kernel(x_ref, w1_ref, b1_ref, w2_ref, b2_ref, w3_ref, b3_ref, o_ref):
    # x_ref: [N_FEATURES, TB]  (batch on lanes)
    x = x_ref[...]

    h1 = jnp.dot(w1_ref[...], x, preferred_element_type=jnp.float32) + b1_ref[...]
    h1 = jnp.cos(h1)                                   # [H1, TB]

    h2 = jnp.dot(w2_ref[...], h1, preferred_element_type=jnp.float32) + b2_ref[...]
    h2 = jnp.maximum(h2, 0.0)                          # [H2, TB]

    out = jnp.dot(w3_ref[...], h2, preferred_element_type=jnp.float32) + b3_ref[...]
    o_ref[...] = out.astype(o_ref.dtype)               # [N_CLASSES, TB] lane-dense store


def net_forward(x, params, *, tb=2048):
    """x: [B, N_FEATURES] float32 -> logits [B, N_CLASSES] float32."""
    w1, b1, w2, b2, w3, b3 = params
    B = x.shape[0]

    # Batch tile on the lane axis: multiple of 128, capped by (padded) batch.
    b_pad128 = 128 * ((B + 127) // 128)
    tb = max(128, min(tb, b_pad128))
    tb = 128 * ((tb + 127) // 128)
    b_pad = tb * ((b_pad128 + tb - 1) // tb)
    grid = (b_pad // tb,)

    # Transposed, lane-dense x: [N_FEATURES, b_pad], zero-padded tail columns.
    xt = jnp.zeros((N_FEATURES, b_pad), x.dtype).at[:, :B].set(x.T)

    def full_spec(shp):
        # Whole array resident in VMEM, same block every grid step.
        return pl.BlockSpec(shp, lambda i: (0,) * len(shp))

    weight_bytes = sum(int(a.size) * 4 for a in (w1, b1, w2, b2, w3, b3))
    cost = pl.CostEstimate(
        flops=2 * b_pad * (N_FEATURES * H1 + H1 * H2 + H2 * N_CLASSES),
        transcendentals=b_pad * H1,
        bytes_accessed=b_pad * (N_FEATURES + N_CLASSES) * 4 + weight_bytes,
    )

    out_t = pl.pallas_call(
        mlp_kernel,
        out_shape=jax.ShapeDtypeStruct((N_CLASSES, b_pad), jnp.float32),
        grid=grid,
        in_specs=[
            pl.BlockSpec((N_FEATURES, tb), lambda i: (0, i)),   # streamed x tile
            full_spec(w1.shape), full_spec(b1.shape),
            full_spec(w2.shape), full_spec(b2.shape),
            full_spec(w3.shape), full_spec(b3.shape),
        ],
        out_specs=pl.BlockSpec((N_CLASSES, tb), lambda i: (0, i)),
        compiler_params=pltpu.CompilerParams(
            dimension_semantics=("parallel",),   # shard batch axis across TCs (v7x)
        ),
        cost_estimate=cost,
    )(xt, w1, b1, w2, b2, w3, b3)

    return out_t[:, :B].T


def init_params(key):
    """Deterministic init mimicking nn.Linear default (uniform +-1/sqrt(fan_in)).
    Weights in PyTorch layout [out, in]; biases as [out, 1] columns."""
    def linear(key, fan_in, fan_out):
        k_w, k_b = jax.random.split(key)
        bound = 1.0 / jnp.sqrt(jnp.float32(fan_in))
        w = jax.random.uniform(k_w, (fan_out, fan_in), jnp.float32, -bound, bound)
        b = jax.random.uniform(k_b, (fan_out, 1), jnp.float32, -bound, bound)
        return w, b

    k1, k2, k3 = jax.random.split(key, 3)
    w1, b1 = linear(k1, N_FEATURES, H1)
    w2, b2 = linear(k2, H1, H2)
    w3, b3 = linear(k3, H2, N_CLASSES)
    return (w1, b1, w2, b2, w3, b3)


def reference_forward(x, params):
    w1, b1, w2, b2, w3, b3 = params
    h1 = jnp.cos(x @ w1.T + b1.T)
    h2 = jnp.maximum(h1 @ w2.T + b2.T, 0.0)
    return h2 @ w3.T + b3.T


if __name__ == "__main__":
    key = jax.random.PRNGKey(0)
    k_params, k_x = jax.random.split(key)

    params = init_params(k_params)
    x = jax.random.normal(k_x, (8, N_FEATURES), jnp.float32)

    out = net_forward(x, params)
    out = jax.block_until_ready(out)

    ref = reference_forward(x, params)
    assert out.shape == (8, N_CLASSES)
    assert jnp.allclose(out, ref, atol=1e-5, rtol=1e-5)

    print("KERNEL_OK")
</pallas_src>

<mosaic_0001>
module attributes {stable_mosaic.version = 11 : i64} {
  func.func @mlp_kernel(%arg0: i32, %arg1: memref<32x128xf32, #tpu.memory_space<vmem>>, %arg2: memref<16x32xf32, #tpu.memory_space<vmem>>, %arg3: memref<16x1xf32, #tpu.memory_space<vmem>>, %arg4: memref<8x16xf32, #tpu.memory_space<vmem>>, %arg5: memref<8x1xf32, #tpu.memory_space<vmem>>, %arg6: memref<2x8xf32, #tpu.memory_space<vmem>>, %arg7: memref<2x1xf32, #tpu.memory_space<vmem>>, %arg8: memref<2x128xf32, #tpu.memory_space<vmem>>) attributes {dimension_semantics = [#tpu.dimension_semantics<parallel>], iteration_bounds = array<i64: 1>, scalar_prefetch = 0 : i64, scratch_operands = 0 : i64, tpu.core_type = #tpu.core_type<tc>, window_params = [{transform_indices = @transform_0, window_bounds = array<i64: 32, 128>}, {pipeline_mode = #tpu.pipeline_mode<synchronous>, transform_indices = @transform_1, window_bounds = array<i64: 16, 32>}, {pipeline_mode = #tpu.pipeline_mode<synchronous>, transform_indices = @transform_2, window_bounds = array<i64: 16, 1>}, {pipeline_mode = #tpu.pipeline_mode<synchronous>, transform_indices = @transform_3, window_bounds = array<i64: 8, 16>}, {pipeline_mode = #tpu.pipeline_mode<synchronous>, transform_indices = @transform_4, window_bounds = array<i64: 8, 1>}, {pipeline_mode = #tpu.pipeline_mode<synchronous>, transform_indices = @transform_5, window_bounds = array<i64: 2, 8>}, {pipeline_mode = #tpu.pipeline_mode<synchronous>, transform_indices = @transform_6, window_bounds = array<i64: 2, 1>}, {transform_indices = @transform_7, window_bounds = array<i64: 2, 128>}]} {
    %c0 = arith.constant 0 : index
    %c0_0 = arith.constant 0 : index
    %0 = vector.load %arg1[%c0, %c0_0] : memref<32x128xf32, #tpu.memory_space<vmem>>, vector<32x128xf32>
    %c0_1 = arith.constant 0 : index
    %c0_2 = arith.constant 0 : index
    %1 = vector.load %arg2[%c0_1, %c0_2] : memref<16x32xf32, #tpu.memory_space<vmem>>, vector<16x32xf32>
    %cst = arith.constant dense<0.000000e+00> : vector<16x128xf32>
    %2 = tpu.matmul %1, %0, %cst {dimension_numbers = #tpu.dot_dimension_numbers<[1], [0], [0], [1], [0, 0, 1, 1], [], []>} : vector<16x32xf32>, vector<32x128xf32>, vector<16x128xf32> -> vector<16x128xf32>
    %c0_3 = arith.constant 0 : index
    %c0_4 = arith.constant 0 : index
    %3 = vector.load %arg3[%c0_3, %c0_4] : memref<16x1xf32, #tpu.memory_space<vmem>>, vector<16x1xf32>
    %4 = vector.broadcast %3 : vector<16x1xf32> to vector<16x128xf32>
    %5 = arith.addf %2, %4 : vector<16x128xf32>
    %6 = math.cos %5 : vector<16x128xf32>
    %c0_5 = arith.constant 0 : index
    %c0_6 = arith.constant 0 : index
    %7 = vector.load %arg4[%c0_5, %c0_6] : memref<8x16xf32, #tpu.memory_space<vmem>>, vector<8x16xf32>
    %cst_7 = arith.constant dense<0.000000e+00> : vector<8x128xf32>
    %8 = tpu.matmul %7, %6, %cst_7 {dimension_numbers = #tpu.dot_dimension_numbers<[1], [0], [0], [1], [0, 0, 1, 1], [], []>} : vector<8x16xf32>, vector<16x128xf32>, vector<8x128xf32> -> vector<8x128xf32>
    %c0_8 = arith.constant 0 : index
    %c0_9 = arith.constant 0 : index
    %9 = vector.load %arg5[%c0_8, %c0_9] : memref<8x1xf32, #tpu.memory_space<vmem>>, vector<8x1xf32>
    %10 = vector.broadcast %9 : vector<8x1xf32> to vector<8x128xf32>
    %11 = arith.addf %8, %10 : vector<8x128xf32>
    %cst_10 = arith.constant 0.000000e+00 : f32
    %12 = vector.broadcast %cst_10 : f32 to vector<8x128xf32>
    %13 = arith.maximumf %11, %12 : vector<8x128xf32>
    %c0_11 = arith.constant 0 : index
    %c0_12 = arith.constant 0 : index
    %14 = vector.load %arg6[%c0_11, %c0_12] : memref<2x8xf32, #tpu.memory_space<vmem>>, vector<2x8xf32>
    %cst_13 = arith.constant dense<0.000000e+00> : vector<2x128xf32>
    %15 = tpu.matmul %14, %13, %cst_13 {dimension_numbers = #tpu.dot_dimension_numbers<[1], [0], [0], [1], [0, 0, 1, 1], [], []>} : vector<2x8xf32>, vector<8x128xf32>, vector<2x128xf32> -> vector<2x128xf32>
    %c0_14 = arith.constant 0 : index
    %c0_15 = arith.constant 0 : index
    %16 = vector.load %arg7[%c0_14, %c0_15] : memref<2x1xf32, #tpu.memory_space<vmem>>, vector<2x1xf32>
    %17 = vector.broadcast %16 : vector<2x1xf32> to vector<2x128xf32>
    %18 = arith.addf %15, %17 : vector<2x128xf32>
    %c0_16 = arith.constant 0 : index
    %c0_17 = arith.constant 0 : index
    %19 = vector.load %arg8[%c0_16, %c0_17] : memref<2x128xf32, #tpu.memory_space<vmem>>, vector<2x128xf32>
    tpu.vector_store %arg8[%c0_16, %c0_17], %18 {strides = array<i32>} : memref<2x128xf32, #tpu.memory_space<vmem>>, vector<2x128xf32>,
    return
  }
  func.func @transform_0(%arg0: i32) -> (i32, i32) {
    %c0_i32 = arith.constant 0 : i32
    %c0_i32_0 = arith.constant 0 : i32
    return %c0_i32, %arg0 : i32, i32
  }
  func.func @transform_1(%arg0: i32) -> (i32, i32) {
    %c0_i32 = arith.constant 0 : i32
    %c0_i32_0 = arith.constant 0 : i32
    %c0_i32_1 = arith.constant 0 : i32
    return %c0_i32, %c0_i32_0 : i32, i32
  }
  func.func @transform_2(%arg0: i32) -> (i32, i32) {
    %c0_i32 = arith.constant 0 : i32
    %c0_i32_0 = arith.constant 0 : i32
    %c0_i32_1 = arith.constant 0 : i32
    return %c0_i32, %c0_i32_0 : i32, i32
  }
  func.func @transform_3(%arg0: i32) -> (i32, i32) {
    %c0_i32 = arith.constant 0 : i32
    %c0_i32_0 = arith.constant 0 : i32
    %c0_i32_1 = arith.constant 0 : i32
    return %c0_i32, %c0_i32_0 : i32, i32
  }
  func.func @transform_4(%arg0: i32) -> (i32, i32) {
    %c0_i32 = arith.constant 0 : i32
    %c0_i32_0 = arith.constant 0 : i32
    %c0_i32_1 = arith.constant 0 : i32
    return %c0_i32, %c0_i32_0 : i32, i32
  }
  func.func @transform_5(%arg0: i32) -> (i32, i32) {
    %c0_i32 = arith.constant 0 : i32
    %c0_i32_0 = arith.constant 0 : i32
    %c0_i32_1 = arith.constant 0 : i32
    return %c0_i32, %c0_i32_0 : i32, i32
  }
  func.func @transform_6(%arg0: i32) -> (i32, i32) {
    %c0_i32 = arith.constant 0 : i32
    %c0_i32_0 = arith.constant 0 : i32
    %c0_i32_1 = arith.constant 0 : i32
    return %c0_i32, %c0_i32_0 : i32, i32
  }
  func.func @transform_7(%arg0: i32) -> (i32, i32) {
    %c0_i32 = arith.constant 0 : i32
    %c0_i32_0 = arith.constant 0 : i32
    return %c0_i32, %arg0 : i32, i32
  }
}

</mosaic_0001>

<llo_original>
// kernel: tpu_custom_call.1
$region0: #{tpu_custom_call.1}
  #allocation0 [shape = 'u32[]', space=smem, size = 0x4, offset = 0x4, fixed_abs, tag = 'smem constant byte address 0x4 - core index']
  #allocation1 [shape = 'u32[144,128]{1,0:T(1,128)}', space=vmem, size = 0x12000, scoped, tag = 'internal scratch']
  %s0 = inlined_call_operand.hbm [shape: f32[32,128], index: 0, kind: input, shape index: {}]
  %s1 = inlined_call_operand.vmem [shape: f32[16,32], index: 1, kind: input, shape index: {}]
  %s2 = inlined_call_operand.vmem [shape: f32[16,1], index: 2, kind: input, shape index: {}]
  %s3 = inlined_call_operand.vmem [shape: f32[8,16], index: 3, kind: input, shape index: {}]
  %s4 = inlined_call_operand.vmem [shape: f32[8,1], index: 4, kind: input, shape index: {}]
  %s5 = inlined_call_operand.vmem [shape: f32[2,8], index: 5, kind: input, shape index: {}]
  %s6 = inlined_call_operand.vmem [shape: f32[2,1], index: 6, kind: input, shape index: {}]
  %s7 = inlined_call_operand.hbm [shape: f32[2,128], index: 7, kind: output, shape index: {}]
  %s8 = sld [smem:[#allocation0]]
  $region42: #{tpu_custom_call.1} parent=0
    _
  %s10 = ssub.s32 1, %s8
  %s11 = scalar_select 0, %s10, %s8
  $region1: #{tpu_custom_call.1} parent=0
    #allocation2 [shape = 'u8[16384]{0}', space=vmem, size = 0x4000, scoped, tag = 'input window, operand 0, single buffered']
    #allocation3 [shape = 's32[1]{0}', space=sflag, size = 0x4, scoped, tag = 'scoped memory for tpu_custom_call.1']
    #allocation4 [shape = 's32[1]{0}', space=sflag, size = 0x4, scoped, tag = 'scoped memory for tpu_custom_call.1']
    #allocation5 [shape = 'u8[1024]{0}', space=vmem, size = 0x400, scoped, tag = 'output window, operand 0, single buffered']
    %12 = vsyncpa [#allocation3], 0
    %13 = vsyncpa [#allocation4], 0
    // Predicated region
    $region2: #{tpu_custom_call.1} parent=1 // pred_check
      _
    $region3: #{tpu_custom_call.1} parent=1 // pred_check_branch
      %15 = sbr.rel (0) target = $region5
    $region4: #{tpu_custom_call.1} parent=1 // pred_region
      %s17 = ssub.s32 512, 512
      %18 = vsyncadd [#allocation3], %s17
      %s19 = sshll.u32 [#allocation2], 4
      %s20 = int_to_ptr.vmem [resolvable:$true] %s19
      %25 = dma.hbm_to_vmem [thread:$0]  %s0, 512, %s20, [#allocation3], 128, 128, 8
    $region5: #{tpu_custom_call.1} parent=1 // pred_fallthru
      _
    // Predicated region
    $region6: #{tpu_custom_call.1} parent=1 // pred_check
      _
    $region7: #{tpu_custom_call.1} parent=1 // pred_check_branch
      %27 = sbr.rel (0) target = $region9
    $region8: #{tpu_custom_call.1} parent=1 // pred_region
      _
    $region9: #{tpu_custom_call.1} parent=1 // pred_fallthru
      _
    // Predicated region
    $region10: #{tpu_custom_call.1} parent=1 // pred_check
      _
    $region11: #{tpu_custom_call.1} parent=1 // pred_check_branch
      %29 = sbr.rel (0) target = $region13
    $region12: #{tpu_custom_call.1} parent=1 // pred_region
      _
    $region13: #{tpu_custom_call.1} parent=1 // pred_fallthru
      _
    // Predicated region
    $region14: #{tpu_custom_call.1} parent=1 // pred_check
      _
    $region15: #{tpu_custom_call.1} parent=1 // pred_check_branch
      %31 = sbr.rel (0) target = $region17
    $region16: #{tpu_custom_call.1} parent=1 // pred_region
      _
    $region17: #{tpu_custom_call.1} parent=1 // pred_fallthru
      _
    // Predicated region
    $region18: #{tpu_custom_call.1} parent=1 // pred_check
      _
    $region19: #{tpu_custom_call.1} parent=1 // pred_check_branch
      %33 = sbr.rel (0) target = $region21
    $region20: #{tpu_custom_call.1} parent=1 // pred_region
      _
    $region21: #{tpu_custom_call.1} parent=1 // pred_fallthru
      _
    // Predicated region
    $region22: #{tpu_custom_call.1} parent=1 // pred_check
      _
    $region23: #{tpu_custom_call.1} parent=1 // pred_check_branch
      %35 = sbr.rel (0) target = $region25
    $region24: #{tpu_custom_call.1} parent=1 // pred_region
      _
    $region25: #{tpu_custom_call.1} parent=1 // pred_fallthru
      _
    // Predicated region
    $region26: #{tpu_custom_call.1} parent=1 // pred_check
      _
    $region27: #{tpu_custom_call.1} parent=1 // pred_check_branch
      %37 = sbr.rel (0) target = $region29
    $region28: #{tpu_custom_call.1} parent=1 // pred_region
      _
    $region29: #{tpu_custom_call.1} parent=1 // pred_fallthru
      _
    // Predicated region
    $region30: #{tpu_custom_call.1} parent=1 // pred_check
      _
    $region31: #{tpu_custom_call.1} parent=1 // pred_check_branch
      %39 = sbr.rel (0) target = $region33
    $region32: #{tpu_custom_call.1} parent=1 // pred_region
      %40 = dma.done [#allocation3], 512
    $region33: #{tpu_custom_call.1} parent=1 // pred_fallthru
      _
    %v41 = vld [vmem:[#allocation2] sm:$0xff]
    %v42 = vld [vmem:[#allocation2 + $0x8] sm:$0xff]
    %v43 = vld [vmem:[#allocation2 + $0x10] sm:$0xff]
    %v44 = vld [vmem:[#allocation2 + $0x18] sm:$0xff]
    %v45 = vld [vmem:[%s1] sm:$0xff]
    %v46 = vld [vmem:[%s1 + $0x8] sm:$0xff]
    %v47 = vld [vmem:[%s2] sm:$0xff]
    %v48 = vld [vmem:[%s2 + $0x8] sm:$0xff]
    %50 = vset.pattern.permute.xlu0 0
    %51 = vperm.xlu0 %50, %v47
    %v52 = vpop.permute.xlu0 %51
    %55 = vset.pattern.permute.xlu0 0
    %56 = vperm.xlu0 %55, %v48
    %v57 = vpop.permute.xlu0 %56
    %vm59 = vcmask 261120
    %v61 = vsel %vm59, %v45, 0
    %v64 = vsel %vm59, %v46, 0
    %66 = vmatprep.subr.mxu0 0.0
    %67 = vmatpush1.msra.mxu0 %v41
    %68 = vmatprep.subr.mxu0 0.0
    %69 = vmatpush1.msra.mxu0 %v42
    %70 = vmatprep.subr.mxu0 0.0
    %71 = vmatpush1.msra.mxu0 %v43
    %72 = vmatprep.subr.mxu0 0.0
    %73 = vmatpush1.msra.mxu0 %v44
    %74 = vmatprep.subr.mxu0 0.0
    %75 = vmatpush1.msra.mxu0 0.0
    %76 = vmatprep.subr.mxu0 0.0
    %77 = vmatpush1.msra.mxu0 0.0
    %78 = vmatprep.subr.mxu0 0.0
    %79 = vmatpush1.msra.mxu0 0.0
    %80 = vmatprep.subr.mxu0 0.0
    %81 = vmatpush1.msra.mxu0 0.0
    %82 = vmatprep.subr.mxu0 0.0
    %83 = vmatpush1.msra.mxu0 0.0
    %84 = vmatprep.subr.mxu0 0.0
    %85 = vmatpush1.msra.mxu0 0.0
    %86 = vmatprep.subr.mxu0 0.0
    %87 = vmatpush1.msra.mxu0 0.0
    %88 = vmatprep.subr.mxu0 0.0
    %89 = vmatpush1.msra.mxu0 0.0
    %90 = vmatprep.subr.mxu0 0.0
    %91 = vmatpush1.msra.mxu0 0.0
    %92 = vmatprep.subr.mxu0 0.0
    %93 = vmatpush1.msra.mxu0 0.0
    %94 = vmatprep.subr.mxu0 0.0
    %95 = vmatpush1.msra.mxu0 0.0
    %96 = vmatprep.subr.mxu0 0.0
    %97 = vmatpush1.msra.mxu0 0.0
    %98 = vmatprep.subr.mxu0 0.0
    %99 = vmatpush1.msra.mxu0 0.0
    %100 = vmatprep.subr.mxu0 0.0
    %101 = vmatpush1.msra.mxu0 0.0
    %102 = vmatprep.subr.mxu0 0.0
    %103 = vmatpush1.msra.mxu0 0.0
    %104 = vmatprep.subr.mxu0 0.0
    %105 = vmatpush1.msra.mxu0 0.0
    %106 = vmatprep.subr.mxu0 0.0
    %107 = vmatpush1.msra.mxu0 0.0
    %108 = vmatprep.subr.mxu0 0.0
    %109 = vmatpush1.msra.mxu0 0.0
    %110 = vmatprep.subr.mxu0 0.0
    %111 = vmatpush1.msra.mxu0 0.0
    %112 = vmatprep.subr.mxu0 0.0
    %113 = vmatpush1.msra.mxu0 0.0
    %114 = vmatprep.subr.mxu0 0.0
    %115 = vmatpush1.msra.mxu0 0.0
    %116 = vmatprep.subr.mxu0 0.0
    %117 = vmatpush1.msra.mxu0 0.0
    %118 = vmatprep.subr.mxu0 0.0
    %119 = vmatpush1.msra.mxu0 0.0
    %120 = vmatprep.subr.mxu0 0.0
    %121 = vmatpush1.msra.mxu0 0.0
    %122 = vmatprep.subr.mxu0 0.0
    %123 = vmatpush1.msra.mxu0 0.0
    %124 = vmatprep.subr.mxu0 0.0
    %125 = vmatpush1.msra.mxu0 0.0
    %126 = vmatprep.subr.mxu0 0.0
    %127 = vmatpush1.msra.mxu0 0.0
    %128 = vmatprep.subr.mxu0 0.0
    %129 = vmatpush1.msra.mxu0 0.0
    %130 = vmatprep.mubr.f32.mxu0 0.0
    %131 = vmatmul.mubr.f32.gmra.mrb[0].mxu0 %v61
    %v132 = vpop.f32.mrb[0].mxu0
    %v133 = vadd.f32 %v52, %v132
    %v134 = vpop.f32.mrb[0].mxu0
    %135 = vmatprep.mubr.f32.mxu0 0.0
    %136 = vmatmul.mubr.f32.gmra.mrb[0].mxu0 %v64
    %v137 = vpop.f32.mrb[0].mxu0
    %v138 = vadd.f32 %v57, %v137
    %v139 = vpop.f32.mrb[0].mxu0
    %140 = vdwg.mxu0
    %v141 = vand.u32 2147483647, %v133
    %vm142 = vcmp.le.f32.partialorder %v141, 0.7853982
    %vm143 = vcmp.lt.s32.totalorder %v133, 0
    %v144 = vand.u32 %v133, 2139095040
    %v145 = vshrl.u32 %v144, 23
    %v146 = vsub.s32 %v145, 127
    %v147 = vand.u32 2147483647, %v133
    %v148 = vand.u32 %v147, 8388607
    %v149 = vor.u32 %v148, 8388608
    %v150 = vsub.s32 0, %v149
    %v151 = vadd.s32 %v146, 1
    %vm152 = vcmp.gt.s32.totalorder %v151, 0
    %v153 = vsel %vm152, %v151, 0
    %v154 = vshrl.u32 %v153, 5
    %v155 = vand.u32 %v153, 31
    %v156 = vsub.s32 32, %v155
    %v157 = vshrl.u32 683565275, %v156
    %v158 = vshll.u32 683565275, %v155
    %v159 = vshrl.u32 2475754826, %v156
    %v160 = vor.u32 %v158, %v159
    %v161 = vshll.u32 2475754826, %v155
    %v162 = vshrl.u32 2131351028, %v156
    %v163 = vor.u32 %v161, %v162
    %v164 = vshll.u32 2131351028, %v155
    %v165 = vshrl.u32 2102212464, %v156
    %v166 = vor.u32 %v164, %v165
    %v167 = vshll.u32 2102212464, %v155
    %v168 = vshrl.u32 920167782, %v156
    %v169 = vor.u32 %v167, %v168
    %v170 = vshll.u32 920167782, %v155
    %v171 = vshrl.u32 1326507024, %v156
    %v172 = vor.u32 %v170, %v171
    %vm173 = vcmp.lt.s32.totalorder %v154, 1
    %vm174 = vcmp.lt.s32.totalorder %v154, 2
    %vm175 = vcmp.lt.s32.totalorder %v154, 3
    %vm176 = vcmp.lt.s32.totalorder %v154, 4
    %v177 = vsel %vm173, %v157, %v160
    %v178 = vsel %vm176, %v166, 2102212464
    %v179 = vsel %vm175, %v163, %v178
    %v180 = vsel %vm174, %v177, %v179
    %v181 = vsel %vm173, %v160, %v163
    %v182 = vsel %vm176, %v169, 920167782
    %v183 = vsel %vm175, %v166, %v182
    %v184 = vsel %vm174, %v181, %v183
    %v185 = vsel %vm173, %v163, %v166
    %v186 = vsel %vm176, %v172, 1326507024
    %v187 = vsel %vm175, %v169, %v186
    %v188 = vsel %vm174, %v185, %v187
    %v189 = vshll.u32 %v149, 8
    %v190 = vmul.u32.u64.compose %v189, %v188
    %v191 = vextract.low.u32 %v190
    %v192 = vextract.high.u32 %v190
    %v193 = vmul.u32.u64.compose %v189, %v184
    %v194 = vextract.low.u32 %v193
    %v195 = vextract.high.u32 %v193
    %v196 = vmul.u32 %v189, %v180
    %v197 = vadd.s32 %v192, %v194
    %vm198 = vc.u32 %v192, %v194
    %v199 = vadd.s32 %v195, 1
    %v200 = vsel %vm198, %v199, %v195
    %v201 = vadd.s32 %v196, %v200
    %v202 = vadd.s32 %v201, 536870912
    %v203 = vshrl.u32 %v202, 30
    %v204 = vshll.u32 %v203, 30
    %v205 = vsub.s32 %v201, %v204
    %vm206 = vcmp.lt.s32.totalorder %v205, 0
    %v207 = vsub.s32 0, %v205
    %v208 = vsel %vm206, %v207, %v205
    %v209 = vclz %v208
    %v210 = vsub.s32 %v209, 2
    %vm211 = vcmp.gt.s32.totalorder 0, %v210
    %v212 = vsel %vm211, 0, %v210
    %v213 = vsub.s32 32, %v212
    %v214 = vshll.u32 %v205, %v212
    %v215 = vshrl.u32 %v197, %v213
    %v216 = vor.u32 %v214, %v215
    %v217 = vsub.s32 4294967266, %v212
    %v218 = vadd.s32 %v217, 127
    %v219 = vshll.u32 %v218, 23
    %v220 = vor.u32 4788187, %v219
    %v221 = vand.u32 2147483647, %v220
    %v223 = vcvt.s32.f32 %v216
    %v224 = vmul.f32 %v223, %v221
    %v225 = vxor.u32 %v224, 2147483648
    %v226 = vsel %vm143, %v225, %v224
    %v227 = vsub.s32 4, %v203
    %v228 = vsel %vm143, %v227, %v203
    %v229 = vsel %vm142, %v133, %v226
    %v230 = vsel %vm142, 0, %v228
    %v231 = vcosq.f32.pop %v229
    %v232 = vsinq.f32.pop %v229
    %vm233 = vweird.f32 %v133
    %v234 = vand.u32 %v230, 3
    %vm235 = vcmp.lt.s32.totalorder %v234, 2
    %vm236 = vcmp.eq.s32.totalorder %v234, 0
    %v237 = vxor.u32 %v232, 2147483648
    %v238 = vsel %vm236, %v231, %v237
    %vm239 = vcmp.eq.s32.totalorder %v234, 2
    %v240 = vxor.u32 %v231, 2147483648
    %v241 = vsel %vm239, %v240, %v232
    %v242 = vsel %vm235, %v238, %v241
    %v243 = vsel %vm233, nan, %v242
    %v244 = vand.u32 2147483647, %v138
    %vm245 = vcmp.le.f32.partialorder %v244, 0.7853982
    %vm246 = vcmp.lt.s32.totalorder %v138, 0
    %v247 = vand.u32 %v138, 2139095040
    %v248 = vshrl.u32 %v247, 23
    %v249 = vsub.s32 %v248, 127
    %v250 = vand.u32 2147483647, %v138
    %v251 = vand.u32 %v250, 8388607
    %v252 = vor.u32 %v251, 8388608
    %v253 = vsub.s32 0, %v252
    %v254 = vadd.s32 %v249, 1
    %vm255 = vcmp.gt.s32.totalorder %v254, 0
    %v256 = vsel %vm255, %v254, 0
    %v257 = vshrl.u32 %v256, 5
    %v258 = vand.u32 %v256, 31
    %v259 = vsub.s32 32, %v258
    %v260 = vshrl.u32 683565275, %v259
    %v261 = vshll.u32 683565275, %v258
    %v262 = vshrl.u32 2475754826, %v259
    %v263 = vor.u32 %v261, %v262
    %v264 = vshll.u32 2475754826, %v258
    %v265 = vshrl.u32 2131351028, %v259
    %v266 = vor.u32 %v264, %v265
    %v267 = vshll.u32 2131351028, %v258
    %v268 = vshrl.u32 2102212464, %v259
    %v269 = vor.u32 %v267, %v268
    %v270 = vshll.u32 2102212464, %v258
    %v271 = vshrl.u32 920167782, %v259
    %v272 = vor.u32 %v270, %v271
    %v273 = vshll.u32 920167782, %v258
    %v274 = vshrl.u32 1326507024, %v259
    %v275 = vor.u32 %v273, %v274
    %vm276 = vcmp.lt.s32.totalorder %v257, 1
    %vm277 = vcmp.lt.s32.totalorder %v257, 2
    %vm278 = vcmp.lt.s32.totalorder %v257, 3
    %vm279 = vcmp.lt.s32.totalorder %v257, 4
    %v280 = vsel %vm276, %v260, %v263
    %v281 = vsel %vm279, %v269, 2102212464
    %v282 = vsel %vm278, %v266, %v281
    %v283 = vsel %vm277, %v280, %v282
    %v284 = vsel %vm276, %v263, %v266
    %v285 = vsel %vm279, %v272, 920167782
    %v286 = vsel %vm278, %v269, %v285
    %v287 = vsel %vm277, %v284, %v286
    %v288 = vsel %vm276, %v266, %v269
    %v289 = vsel %vm279, %v275, 1326507024
    %v290 = vsel %vm278, %v272, %v289
    %v291 = vsel %vm277, %v288, %v290
    %v292 = vshll.u32 %v252, 8
    %v293 = vmul.u32.u64.compose %v292, %v291
    %v294 = vextract.low.u32 %v293
    %v295 = vextract.high.u32 %v293
    %v296 = vmul.u32.u64.compose %v292, %v287
    %v297 = vextract.low.u32 %v296
    %v298 = vextract.high.u32 %v296
    %v299 = vmul.u32 %v292, %v283
    %v300 = vadd.s32 %v295, %v297
    %vm301 = vc.u32 %v295, %v297
    %v302 = vadd.s32 %v298, 1
    %v303 = vsel %vm301, %v302, %v298
    %v304 = vadd.s32 %v299, %v303
    %v305 = vadd.s32 %v304, 536870912
    %v306 = vshrl.u32 %v305, 30
    %v307 = vshll.u32 %v306, 30
    %v308 = vsub.s32 %v304, %v307
    %vm309 = vcmp.lt.s32.totalorder %v308, 0
    %v310 = vsub.s32 0, %v308
    %v311 = vsel %vm309, %v310, %v308
    %v312 = vclz %v311
    %v313 = vsub.s32 %v312, 2
    %vm314 = vcmp.gt.s32.totalorder 0, %v313
    %v315 = vsel %vm314, 0, %v313
    %v316 = vsub.s32 32, %v315
    %v317 = vshll.u32 %v308, %v315
    %v318 = vshrl.u32 %v300, %v316
    %v319 = vor.u32 %v317, %v318
    %v320 = vsub.s32 4294967266, %v315
    %v321 = vadd.s32 %v320, 127
    %v322 = vshll.u32 %v321, 23
    %v323 = vor.u32 4788187, %v322
    %v324 = vand.u32 2147483647, %v323
    %v326 = vcvt.s32.f32 %v319
    %v327 = vmul.f32 %v326, %v324
    %v328 = vxor.u32 %v327, 2147483648
    %v329 = vsel %vm246, %v328, %v327
    %v330 = vsub.s32 4, %v306
    %v331 = vsel %vm246, %v330, %v306
    %v332 = vsel %vm245, %v138, %v329
    %v333 = vsel %vm245, 0, %v331
    %v334 = vcosq.f32.pop %v332
    %v335 = vsinq.f32.pop %v332
    %vm336 = vweird.f32 %v138
    %v337 = vand.u32 %v333, 3
    %vm338 = vcmp.lt.s32.totalorder %v337, 2
    %vm339 = vcmp.eq.s32.totalorder %v337, 0
    %v340 = vxor.u32 %v335, 2147483648
    %v341 = vsel %vm339, %v334, %v340
    %vm342 = vcmp.eq.s32.totalorder %v337, 2
    %v343 = vxor.u32 %v334, 2147483648
    %v344 = vsel %vm342, %v343, %v335
    %v345 = vsel %vm338, %v341, %v344
    %v346 = vsel %vm336, nan, %v345
    %v347 = vld [vmem:[%s3] sm:$0xff]
    %v348 = vld [vmem:[%s4] sm:$0xff]
    %350 = vset.pattern.permute.xlu0 0
    %351 = vperm.xlu0 %350, %v348
    %v352 = vpop.permute.xlu0 %351
    %vm354 = vcmask 130048
    %v356 = vsel %vm354, %v347, 0
    %358 = vmatprep.subr.mxu0 0.0
    %359 = vmatpush1.msra.mxu0 %v243
    %360 = vmatprep.subr.mxu0 0.0
    %361 = vmatpush1.msra.mxu0 %v346
    %362 = vmatprep.subr.mxu0 0.0
    %363 = vmatpush1.msra.mxu0 0.0
    %364 = vmatprep.subr.mxu0 0.0
    %365 = vmatpush1.msra.mxu0 0.0
    %366 = vmatprep.subr.mxu0 0.0
    %367 = vmatpush1.msra.mxu0 0.0
    %368 = vmatprep.subr.mxu0 0.0
    %369 = vmatpush1.msra.mxu0 0.0
    %370 = vmatprep.subr.mxu0 0.0
    %371 = vmatpush1.msra.mxu0 0.0
    %372 = vmatprep.subr.mxu0 0.0
    %373 = vmatpush1.msra.mxu0 0.0
    %374 = vmatprep.subr.mxu0 0.0
    %375 = vmatpush1.msra.mxu0 0.0
    %376 = vmatprep.subr.mxu0 0.0
    %377 = vmatpush1.msra.mxu0 0.0
    %378 = vmatprep.subr.mxu0 0.0
    %379 = vmatpush1.msra.mxu0 0.0
    %380 = vmatprep.subr.mxu0 0.0
    %381 = vmatpush1.msra.mxu0 0.0
    %382 = vmatprep.subr.mxu0 0.0
    %383 = vmatpush1.msra.mxu0 0.0
    %384 = vmatprep.subr.mxu0 0.0
    %385 = vmatpush1.msra.mxu0 0.0
    %386 = vmatprep.subr.mxu0 0.0
    %387 = vmatpush1.msra.mxu0 0.0
    %388 = vmatprep.subr.mxu0 0.0
    %389 = vmatpush1.msra.mxu0 0.0
    %390 = vmatprep.subr.mxu0 0.0
    %391 = vmatpush1.msra.mxu0 0.0
    %392 = vmatprep.subr.mxu0 0.0
    %393 = vmatpush1.msra.mxu0 0.0
    %394 = vmatprep.subr.mxu0 0.0
    %395 = vmatpush1.msra.mxu0 0.0
    %396 = vmatprep.subr.mxu0 0.0
    %397 = vmatpush1.msra.mxu0 0.0
    %398 = vmatprep.subr.mxu0 0.0
    %399 = vmatpush1.msra.mxu0 0.0
    %400 = vmatprep.subr.mxu0 0.0
    %401 = vmatpush1.msra.mxu0 0.0
    %402 = vmatprep.subr.mxu0 0.0
    %403 = vmatpush1.msra.mxu0 0.0
    %404 = vmatprep.subr.mxu0 0.0
    %405 = vmatpush1.msra.mxu0 0.0
    %406 = vmatprep.subr.mxu0 0.0
    %407 = vmatpush1.msra.mxu0 0.0
    %408 = vmatprep.subr.mxu0 0.0
    %409 = vmatpush1.msra.mxu0 0.0
    %410 = vmatprep.subr.mxu0 0.0
    %411 = vmatpush1.msra.mxu0 0.0
    %412 = vmatprep.subr.mxu0 0.0
    %413 = vmatpush1.msra.mxu0 0.0
    %414 = vmatprep.subr.mxu0 0.0
    %415 = vmatpush1.msra.mxu0 0.0
    %416 = vmatprep.subr.mxu0 0.0
    %417 = vmatpush1.msra.mxu0 0.0
    %418 = vmatprep.subr.mxu0 0.0
    %419 = vmatpush1.msra.mxu0 0.0
    %420 = vmatprep.subr.mxu0 0.0
    %421 = vmatpush1.msra.mxu0 0.0
    %422 = vmatprep.mubr.f32.mxu0 0.0
    %423 = vmatmul.mubr.f32.gmra.mrb[0].mxu0 %v356
    %v424 = vpop.f32.mrb[0].mxu0
    %v425 = vadd.f32 %v352, %v424
    %v426 = vpop.f32.mrb[0].mxu0
    %427 = vdwg.mxu0
    %v428 = vmax.f32 %v425, 0.0
    %v429 = vld [vmem:[%s5] sm:$0x3]
    %v430 = vld [vmem:[%s6] sm:$0x3]
    %432 = vset.pattern.permute.xlu0 0
    %433 = vperm.xlu0 %432, %v430
    %v434 = vpop.permute.xlu0 %433
    %vm436 = vcmask 64512
    %v438 = vsel %vm436, %v429, 0
    %440 = vmatprep.subr.mxu0 0.0
    %441 = vmatpush1.msra.mxu0 %v428
    %442 = vmatprep.subr.mxu0 0.0
    %443 = vmatpush1.msra.mxu0 0.0
    %444 = vmatprep.subr.mxu0 0.0
    %445 = vmatpush1.msra.mxu0 0.0
    %446 = vmatprep.subr.mxu0 0.0
    %447 = vmatpush1.msra.mxu0 0.0
    %448 = vmatprep.subr.mxu0 0.0
    %449 = vmatpush1.msra.mxu0 0.0
    %450 = vmatprep.subr.mxu0 0.0
    %451 = vmatpush1.msra.mxu0 0.0
    %452 = vmatprep.subr.mxu0 0.0
    %453 = vmatpush1.msra.mxu0 0.0
    %454 = vmatprep.subr.mxu0 0.0
    %455 = vmatpush1.msra.mxu0 0.0
    %456 = vmatprep.subr.mxu0 0.0
    %457 = vmatpush1.msra.mxu0 0.0
    %458 = vmatprep.subr.mxu0 0.0
    %459 = vmatpush1.msra.mxu0 0.0
    %460 = vmatprep.subr.mxu0 0.0
    %461 = vmatpush1.msra.mxu0 0.0
    %462 = vmatprep.subr.mxu0 0.0
    %463 = vmatpush1.msra.mxu0 0.0
    %464 = vmatprep.subr.mxu0 0.0
    %465 = vmatpush1.msra.mxu0 0.0
    %466 = vmatprep.subr.mxu0 0.0
    %467 = vmatpush1.msra.mxu0 0.0
    %468 = vmatprep.subr.mxu0 0.0
    %469 = vmatpush1.msra.mxu0 0.0
    %470 = vmatprep.subr.mxu0 0.0
    %471 = vmatpush1.msra.mxu0 0.0
    %472 = vmatprep.subr.mxu0 0.0
    %473 = vmatpush1.msra.mxu0 0.0
    %474 = vmatprep.subr.mxu0 0.0
    %475 = vmatpush1.msra.mxu0 0.0
    %476 = vmatprep.subr.mxu0 0.0
    %477 = vmatpush1.msra.mxu0 0.0
    %478 = vmatprep.subr.mxu0 0.0
    %479 = vmatpush1.msra.mxu0 0.0
    %480 = vmatprep.subr.mxu0 0.0
    %481 = vmatpush1.msra.mxu0 0.0
    %482 = vmatprep.subr.mxu0 0.0
    %483 = vmatpush1.msra.mxu0 0.0
    %484 = vmatprep.subr.mxu0 0.0
    %485 = vmatpush1.msra.mxu0 0.0
    %486 = vmatprep.subr.mxu0 0.0
    %487 = vmatpush1.msra.mxu0 0.0
    %488 = vmatprep.subr.mxu0 0.0
    %489 = vmatpush1.msra.mxu0 0.0
    %490 = vmatprep.subr.mxu0 0.0
    %491 = vmatpush1.msra.mxu0 0.0
    %492 = vmatprep.subr.mxu0 0.0
    %493 = vmatpush1.msra.mxu0 0.0
    %494 = vmatprep.subr.mxu0 0.0
    %495 = vmatpush1.msra.mxu0 0.0
    %496 = vmatprep.subr.mxu0 0.0
    %497 = vmatpush1.msra.mxu0 0.0
    %498 = vmatprep.subr.mxu0 0.0
    %499 = vmatpush1.msra.mxu0 0.0
    %500 = vmatprep.subr.mxu0 0.0
    %501 = vmatpush1.msra.mxu0 0.0
    %502 = vmatprep.subr.mxu0 0.0
    %503 = vmatpush1.msra.mxu0 0.0
    %504 = vmatprep.mubr.f32.mxu0 0.0
    %505 = vmatmul.mubr.f32.gmra.mrb[0].mxu0 %v438
    %v506 = vpop.f32.mrb[0].mxu0
    %v507 = vadd.f32 %v434, %v506
    %v508 = vpop.f32.mrb[0].mxu0
    %509 = vdwg.mxu0
    %510 = vst [vmem:[#allocation5] sm:$0x3] %v507
    // Predicated region
    $region34: #{tpu_custom_call.1} parent=1 // pred_check
      _
    $region35: #{tpu_custom_call.1} parent=1 // pred_check_branch
      %512 = sbr.rel (0) target = $region37
    $region36: #{tpu_custom_call.1} parent=1 // pred_region
      %s514 = ssub.s32 32, 32
      %515 = vsyncadd [#allocation4], %s514
      %s517 = sshll.u32 [#allocation5], 4
      %s518 = int_to_ptr.vmem [resolvable:$true] %s517
      %520 = dma.vmem_to_hbm [thread:$0]  %s518, 32, %s7, [#allocation4]
    $region37: #{tpu_custom_call.1} parent=1 // pred_fallthru
      _
    // Predicated region
    $region38: #{tpu_custom_call.1} parent=1 // pred_check
      _
    $region39: #{tpu_custom_call.1} parent=1 // pred_check_branch
      %522 = sbr.rel (0) target = $region41
    $region40: #{tpu_custom_call.1} parent=1 // pred_region
      %523 = dma.done [#allocation4], 32
    $region41: #{tpu_custom_call.1} parent=1 // pred_fallthru
      _
    %524 = vsyncpa [#allocation3], 1
    %525 = vsyncpa [#allocation4], 1

</llo_original>
